<compile_context>
chip_gen: v6e
topology: v6e:2x2x1
jax: 0.10.0
libtpu: 0.0.40
codegen_flags: <defaults>
</compile_context>

<pallas_src>
import math
from functools import partial

import jax
import jax.numpy as jnp
from jax.experimental import pallas as pl
from jax.experimental.pallas import tpu as pltpu

SCALE = math.sqrt(0.5)  # torch.sqrt(torch.FloatTensor([0.5]))


def _encoder_kernel(emb_ref, w_e2h_ref, b_e2h_ref, w_conv_ref, b_conv_ref,
                    w_h2e_ref, b_h2e_ref,
                    conved_ref, combined_ref, xpad_ref,
                    *, n_layers, kernel_size, seq_len, hid_dim, batch_tile):
    K, L, H, Bt = kernel_size, seq_len, hid_dim, batch_tile
    pad = (K - 1) // 2
    M = Bt * L

    emb16 = emb_ref[...].reshape(M, -1)                                   # (M, E) bf16

    # emb2hid linear: bf16 x bf16 -> f32 accumulate
    x = jnp.dot(emb16, w_e2h_ref[...],
                preferred_element_type=jnp.float32) + b_e2h_ref[...]      # (M, H) f32

    # Zero-haloed scratch: halo rows stay zero; interior is rewritten each layer.
    xpad_ref[...] = jnp.zeros_like(xpad_ref)

    def layer_step(l, x):
        # Stage current activations into the padded scratch (per-sequence halo,
        # so folding batch into M cannot leak across sequence boundaries).
        xpad_ref[:, pl.ds(pad, L), :] = x.reshape(Bt, L, H)
        # K shifted taps as plain static slices (no roll, no mask), stacked on lanes.
        taps = [xpad_ref[:, pl.ds(j, L), :].reshape(M, H) for j in range(K)]
        x_taps = jnp.concatenate(taps, axis=-1).astype(jnp.bfloat16)      # (M, K*H)
        # Fused conv: all K taps + both GLU halves in a single MXU matmul.
        conv = jnp.dot(x_taps, w_conv_ref[l],
                       preferred_element_type=jnp.float32) + b_conv_ref[l]  # (M, 2H)
        glu = conv[:, :H] * jax.nn.sigmoid(conv[:, H:])                   # F.glu(dim=1)
        return (glu + x) * SCALE                                          # residual

    if n_layers <= 8:
        # Small layer counts: full unroll keeps everything visible to the scheduler.
        for l in range(n_layers):
            x = layer_step(l, x)
    else:
        # Many layers: bound live ranges / instruction stream growth.
        x = jax.lax.fori_loop(0, n_layers, layer_step, x)

    # hid2emb linear + combined output
    conved = jnp.dot(x.astype(jnp.bfloat16), w_h2e_ref[...],
                     preferred_element_type=jnp.float32) + b_h2e_ref[...]  # (M, E)
    combined = (conved + emb16.astype(jnp.float32)) * SCALE
    conved_ref[...] = conved.reshape(Bt, L, -1)
    combined_ref[...] = combined.reshape(Bt, L, -1)


def _pick_batch_tile(B, L, target_rows=512):
    """Largest divisor of B whose tile has <= target_rows rows, preferring to leave
    >= 2 grid tiles so the "parallel" grid axis can still shard across v7x's 2 TCs."""
    divs = [d for d in range(1, B + 1) if B % d == 0]
    fit = [d for d in divs if d * L <= target_rows] or [1]
    multi = [d for d in fit if B // d >= 2]
    return max(multi) if multi else max(fit)


def encoder_forward(src, params, *, n_layers, kernel_size, batch_tile=None):
    B, L = src.shape
    E = params["tok_embedding"].shape[1]
    H = params["w_e2h"].shape[0]
    K = kernel_size
    assert K % 2 == 1, "same-length conv requires odd kernel_size"

    # --- glue (plain JAX): embedding gathers, casts, weight re-layout ---
    tok_emb = params["tok_embedding"][src]                                # (B, L, E)
    pos_emb = params["pos_embedding"][:L][None, :, :]                     # (1, L, E)
    embedded = (tok_emb + pos_emb).astype(jnp.bfloat16)                   # dropout = identity

    w_e2h = params["w_e2h"].T.astype(jnp.bfloat16)                        # (E, H)
    b_e2h = params["b_e2h"][None, :].astype(jnp.float32)                  # (1, H)
    w_h2e = params["w_h2e"].T.astype(jnp.bfloat16)                        # (H, E)
    b_h2e = params["b_h2e"][None, :].astype(jnp.float32)                  # (1, E)

    # Conv1d(H -> 2H, K) re-laid out as one fused matmul weight per layer:
    #   w_conv[l, j*H + i, o] = conv_w[l, o, i, j]
    # (value half o < H and gate half o >= H share the output axis).
    w_conv = jnp.transpose(params["conv_w"], (0, 3, 2, 1))                # (nl, K, H, 2H)
    w_conv = w_conv.reshape(n_layers, K * H, 2 * H).astype(jnp.bfloat16)  # (nl, K*H, 2H)
    b_conv = params["conv_b"][:, None, :].astype(jnp.float32)             # (nl, 1, 2H)

    if batch_tile is None:
        batch_tile = _pick_batch_tile(B, L)
    Bt = batch_tile
    assert B % Bt == 0, "batch_tile must divide batch"
    pad = (K - 1) // 2

    kernel = partial(_encoder_kernel, n_layers=n_layers, kernel_size=K,
                     seq_len=L, hid_dim=H, batch_tile=Bt)

    # NOTE: weight BlockSpecs use constant index_maps, so they are DMA'd once and
    # stay VMEM-resident across the batch grid.  For very large H / n_layers on
    # v7x (64 MiB VMEM) switch to a ("tile", "layer") grid streaming (1, K*H, 2H)
    # weight blocks per layer instead.
    conved, combined = pl.pallas_call(
        kernel,
        out_shape=(jax.ShapeDtypeStruct((B, L, E), jnp.float32),
                   jax.ShapeDtypeStruct((B, L, E), jnp.float32)),
        grid=(B // Bt,),
        in_specs=[
            pl.BlockSpec((Bt, L, E), lambda b: (b, 0, 0)),                # embedded (bf16)
            pl.BlockSpec((E, H), lambda b: (0, 0)),                       # w_e2h.T
            pl.BlockSpec((1, H), lambda b: (0, 0)),                       # b_e2h
            pl.BlockSpec((n_layers, K * H, 2 * H), lambda b: (0, 0, 0)),  # fused conv W
            pl.BlockSpec((n_layers, 1, 2 * H), lambda b: (0, 0, 0)),      # conv bias
            pl.BlockSpec((H, E), lambda b: (0, 0)),                       # w_h2e.T
            pl.BlockSpec((1, E), lambda b: (0, 0)),                       # b_h2e
        ],
        out_specs=(pl.BlockSpec((Bt, L, E), lambda b: (b, 0, 0)),
                   pl.BlockSpec((Bt, L, E), lambda b: (b, 0, 0))),
        scratch_shapes=[pltpu.VMEM((Bt, L + 2 * pad, H), jnp.float32)],   # padded taps
        compiler_params=pltpu.CompilerParams(
            dimension_semantics=("parallel",),
            vmem_limit_bytes=32 * 1024 * 1024),
    )(embedded, w_e2h, b_e2h, w_conv, b_conv, w_h2e, b_h2e)
    return conved, combined


def encoder_reference(src, params, *, n_layers, kernel_size):
    """Pure-JAX f32 reference mirroring the PyTorch forward (eval mode)."""
    L = src.shape[1]
    H = params["w_e2h"].shape[0]
    pad = (kernel_size - 1) // 2
    embedded = params["tok_embedding"][src] + params["pos_embedding"][:L][None]
    x = embedded @ params["w_e2h"].T + params["b_e2h"]                    # (B, L, H)
    x = jnp.transpose(x, (0, 2, 1))                                       # (B, H, L)
    for l in range(n_layers):
        W = params["conv_w"][l]
        b = params["conv_b"][l]
        conv = jax.lax.conv_general_dilated(
            x, W, (1,), [(pad, pad)],
            dimension_numbers=("NCH", "OIH", "NCH")) + b[None, :, None]
        a, g = conv[:, :H], conv[:, H:]
        x = (a * jax.nn.sigmoid(g) + x) * SCALE
    conved = jnp.transpose(x, (0, 2, 1)) @ params["w_h2e"].T + params["b_h2e"]
    combined = (conved + embedded) * SCALE
    return conved, combined


def init_params(key, input_dim, emb_dim, hid_dim, n_layers, kernel_size, seq_length):
    keys = jax.random.split(key, 8)
    s = 0.1
    f32 = jnp.float32
    return {
        "tok_embedding": s * jax.random.normal(keys[0], (input_dim, emb_dim), f32),
        "pos_embedding": s * jax.random.normal(keys[1], (seq_length, emb_dim), f32),
        "w_e2h": s * jax.random.normal(keys[2], (hid_dim, emb_dim), f32),
        "b_e2h": s * jax.random.normal(keys[3], (hid_dim,), f32),
        "w_h2e": s * jax.random.normal(keys[4], (emb_dim, hid_dim), f32),
        "b_h2e": s * jax.random.normal(keys[5], (emb_dim,), f32),
        "conv_w": s * jax.random.normal(
            keys[6], (n_layers, 2 * hid_dim, hid_dim, kernel_size), f32),
        "conv_b": s * jax.random.normal(keys[7], (n_layers, 2 * hid_dim), f32),
    }


if __name__ == "__main__":
    B, L = 2, 8
    input_dim, emb_dim, hid_dim = 50, 32, 32
    n_layers, kernel_size, seq_length = 2, 3, 100

    key = jax.random.PRNGKey(0)
    pkey, skey = jax.random.split(key)
    params = init_params(pkey, input_dim, emb_dim, hid_dim,
                         n_layers, kernel_size, seq_length)
    src = jax.random.randint(skey, (B, L), 0, input_dim, dtype=jnp.int32)

    conved, combined = encoder_forward(src, params,
                                       n_layers=n_layers, kernel_size=kernel_size)
    jax.block_until_ready((conved, combined))

    ref_conved, ref_combined = encoder_reference(src, params,
                                                 n_layers=n_layers,
                                                 kernel_size=kernel_size)
    assert conved.shape == (B, L, emb_dim) and combined.shape == (B, L, emb_dim)
    # bf16 matmul inputs with f32 accumulation -> relaxed tolerance vs f32 reference
    assert jnp.allclose(conved, ref_conved, atol=2e-2, rtol=2e-2)
    assert jnp.allclose(combined, ref_combined, atol=2e-2, rtol=2e-2)
    print("KERNEL_OK")
</pallas_src>

<mosaic_0001>
module attributes {stable_mosaic.version = 11 : i64} {
  func.func @_encoder_kernel(%arg0: i32, %arg1: memref<1x8x32xbf16, #tpu.memory_space<vmem>>, %arg2: memref<32x32xbf16, #tpu.memory_space<vmem>>, %arg3: memref<1x32xf32, #tpu.memory_space<vmem>>, %arg4: memref<2x96x64xbf16, #tpu.memory_space<vmem>>, %arg5: memref<2x1x64xf32, #tpu.memory_space<vmem>>, %arg6: memref<32x32xbf16, #tpu.memory_space<vmem>>, %arg7: memref<1x32xf32, #tpu.memory_space<vmem>>, %arg8: memref<1x8x32xf32, #tpu.memory_space<vmem>>, %arg9: memref<1x8x32xf32, #tpu.memory_space<vmem>>, %arg10: memref<1x10x32xf32, #tpu.memory_space<vmem>>) attributes {dimension_semantics = [#tpu.dimension_semantics<parallel>], iteration_bounds = array<i64: 2>, scalar_prefetch = 0 : i64, scratch_operands = 1 : i64, tpu.core_type = #tpu.core_type<tc>, window_params = [{transform_indices = @transform_0, window_bounds = array<i64: 1, 8, 32>}, {pipeline_mode = #tpu.pipeline_mode<synchronous>, transform_indices = @transform_1, window_bounds = array<i64: 32, 32>}, {pipeline_mode = #tpu.pipeline_mode<synchronous>, transform_indices = @transform_2, window_bounds = array<i64: 1, 32>}, {pipeline_mode = #tpu.pipeline_mode<synchronous>, transform_indices = @transform_3, window_bounds = array<i64: 2, 96, 64>}, {pipeline_mode = #tpu.pipeline_mode<synchronous>, transform_indices = @transform_4, window_bounds = array<i64: 2, 1, 64>}, {pipeline_mode = #tpu.pipeline_mode<synchronous>, transform_indices = @transform_5, window_bounds = array<i64: 32, 32>}, {pipeline_mode = #tpu.pipeline_mode<synchronous>, transform_indices = @transform_6, window_bounds = array<i64: 1, 32>}, {transform_indices = @transform_7, window_bounds = array<i64: 1, 8, 32>}, {transform_indices = @transform_8, window_bounds = array<i64: 1, 8, 32>}]} {
    %c0 = arith.constant 0 : index
    %c0_0 = arith.constant 0 : index
    %c0_1 = arith.constant 0 : index
    %0 = vector.load %arg1[%c0, %c0_0, %c0_1] : memref<1x8x32xbf16, #tpu.memory_space<vmem>>, vector<1x8x32xbf16>
    %1 = vector.shape_cast %0 : vector<1x8x32xbf16> to vector<8x32xbf16>
    %c0_2 = arith.constant 0 : index
    %c0_3 = arith.constant 0 : index
    %2 = vector.load %arg2[%c0_2, %c0_3] : memref<32x32xbf16, #tpu.memory_space<vmem>>, vector<32x32xbf16>
    %cst = arith.constant dense<0.000000e+00> : vector<8x32xf32>
    %3 = tpu.matmul %1, %2, %cst {dimension_numbers = #tpu.dot_dimension_numbers<[1], [0], [0], [1], [0, 0, 1, 1], [], []>} : vector<8x32xbf16>, vector<32x32xbf16>, vector<8x32xf32> -> vector<8x32xf32>
    %c0_4 = arith.constant 0 : index
    %c0_5 = arith.constant 0 : index
    %4 = vector.load %arg3[%c0_4, %c0_5] : memref<1x32xf32, #tpu.memory_space<vmem>>, vector<1x32xf32>
    %5 = vector.broadcast %4 : vector<1x32xf32> to vector<8x32xf32>
    %6 = arith.addf %3, %5 : vector<8x32xf32>
    %cst_6 = arith.constant 0.000000e+00 : f32
    %7 = vector.broadcast %cst_6 : f32 to vector<1x10x32xf32>
    %c0_7 = arith.constant 0 : index
    %c0_8 = arith.constant 0 : index
    %c0_9 = arith.constant 0 : index
    %8 = vector.load %arg10[%c0_7, %c0_8, %c0_9] : memref<1x10x32xf32, #tpu.memory_space<vmem>>, vector<1x10x32xf32>
    tpu.vector_store %arg10[%c0_7, %c0_8, %c0_9], %7 {strides = array<i32>} : memref<1x10x32xf32, #tpu.memory_space<vmem>>, vector<1x10x32xf32>,
    %9 = vector.shape_cast %6 : vector<8x32xf32> to vector<1x8x32xf32>
    %c0_10 = arith.constant 0 : index
    %c1 = arith.constant 1 : index
    %c0_11 = arith.constant 0 : index
    %10 = vector.load %arg10[%c0_10, %c1, %c0_11] : memref<1x10x32xf32, #tpu.memory_space<vmem>>, vector<1x8x32xf32>
    tpu.vector_store %arg10[%c0_10, %c1, %c0_11], %9 {strides = array<i32>} : memref<1x10x32xf32, #tpu.memory_space<vmem>>, vector<1x8x32xf32>,
    %c0_12 = arith.constant 0 : index
    %c0_13 = arith.constant 0 : index
    %c0_14 = arith.constant 0 : index
    %11 = vector.load %arg10[%c0_12, %c0_13, %c0_14] : memref<1x10x32xf32, #tpu.memory_space<vmem>>, vector<1x8x32xf32>
    %12 = vector.shape_cast %11 : vector<1x8x32xf32> to vector<8x32xf32>
    %c0_15 = arith.constant 0 : index
    %c1_16 = arith.constant 1 : index
    %c0_17 = arith.constant 0 : index
    %13 = vector.load %arg10[%c0_15, %c1_16, %c0_17] : memref<1x10x32xf32, #tpu.memory_space<vmem>>, vector<1x8x32xf32>
    %14 = vector.shape_cast %13 : vector<1x8x32xf32> to vector<8x32xf32>
    %c0_18 = arith.constant 0 : index
    %c2 = arith.constant 2 : index
    %c0_19 = arith.constant 0 : index
    %15 = vector.load %arg10[%c0_18, %c2, %c0_19] : memref<1x10x32xf32, #tpu.memory_space<vmem>>, vector<1x8x32xf32>
    %16 = vector.shape_cast %15 : vector<1x8x32xf32> to vector<8x32xf32>
    %17 = tpu.concatenate %12, %14, %16 in 1 : vector<8x32xf32>, vector<8x32xf32>, vector<8x32xf32> -> vector<8x96xf32>
    %18 = arith.truncf %17 : vector<8x96xf32> to vector<8x96xbf16>
    %c0_20 = arith.constant 0 : index
    %c0_21 = arith.constant 0 : index
    %c0_22 = arith.constant 0 : index
    %19 = vector.load %arg4[%c0_20, %c0_21, %c0_22] : memref<2x96x64xbf16, #tpu.memory_space<vmem>>, vector<1x96x64xbf16>
    %20 = vector.shape_cast %19 : vector<1x96x64xbf16> to vector<96x64xbf16>
    %cst_23 = arith.constant dense<0.000000e+00> : vector<8x64xf32>
    %21 = tpu.matmul %18, %20, %cst_23 {dimension_numbers = #tpu.dot_dimension_numbers<[1], [0], [0], [1], [0, 0, 1, 1], [], []>} : vector<8x96xbf16>, vector<96x64xbf16>, vector<8x64xf32> -> vector<8x64xf32>
    %c0_24 = arith.constant 0 : index
    %c0_25 = arith.constant 0 : index
    %c0_26 = arith.constant 0 : index
    %22 = vector.load %arg5[%c0_24, %c0_25, %c0_26] : memref<2x1x64xf32, #tpu.memory_space<vmem>>, vector<1x1x64xf32>
    %23 = vector.shape_cast %22 : vector<1x1x64xf32> to vector<1x64xf32>
    %24 = vector.broadcast %23 : vector<1x64xf32> to vector<8x64xf32>
    %25 = arith.addf %21, %24 : vector<8x64xf32>
    %26 = vector.extract_strided_slice %25 {offsets = [0, 0], sizes = [8, 32], strides = [1, 1]} : vector<8x64xf32> to vector<8x32xf32>
    %27 = vector.extract_strided_slice %25 {offsets = [0, 32], sizes = [8, 32], strides = [1, 1]} : vector<8x64xf32> to vector<8x32xf32>
    %28 = arith.negf %27 : vector<8x32xf32>
    %29 = math.exp %28 : vector<8x32xf32>
    %cst_27 = arith.constant 1.000000e+00 : f32
    %30 = vector.broadcast %cst_27 : f32 to vector<8x32xf32>
    %31 = arith.addf %30, %29 : vector<8x32xf32>
    %32 = arith.divf %30, %31 : vector<8x32xf32>
    %33 = arith.mulf %26, %32 : vector<8x32xf32>
    %34 = arith.addf %33, %6 : vector<8x32xf32>
    %cst_28 = arith.constant 0.707106769 : f32
    %35 = vector.broadcast %cst_28 : f32 to vector<8x32xf32>
    %36 = arith.mulf %34, %35 : vector<8x32xf32>
    %37 = vector.shape_cast %36 : vector<8x32xf32> to vector<1x8x32xf32>
    %c0_29 = arith.constant 0 : index
    %c1_30 = arith.constant 1 : index
    %c0_31 = arith.constant 0 : index
    %38 = vector.load %arg10[%c0_29, %c1_30, %c0_31] : memref<1x10x32xf32, #tpu.memory_space<vmem>>, vector<1x8x32xf32>
    tpu.vector_store %arg10[%c0_29, %c1_30, %c0_31], %37 {strides = array<i32>} : memref<1x10x32xf32, #tpu.memory_space<vmem>>, vector<1x8x32xf32>,
    %c0_32 = arith.constant 0 : index
    %c0_33 = arith.constant 0 : index
    %c0_34 = arith.constant 0 : index
    %39 = vector.load %arg10[%c0_32, %c0_33, %c0_34] : memref<1x10x32xf32, #tpu.memory_space<vmem>>, vector<1x8x32xf32>
    %40 = vector.shape_cast %39 : vector<1x8x32xf32> to vector<8x32xf32>
    %c0_35 = arith.constant 0 : index
    %c1_36 = arith.constant 1 : index
    %c0_37 = arith.constant 0 : index
    %41 = vector.load %arg10[%c0_35, %c1_36, %c0_37] : memref<1x10x32xf32, #tpu.memory_space<vmem>>, vector<1x8x32xf32>
    %42 = vector.shape_cast %41 : vector<1x8x32xf32> to vector<8x32xf32>
    %c0_38 = arith.constant 0 : index
    %c2_39 = arith.constant 2 : index
    %c0_40 = arith.constant 0 : index
    %43 = vector.load %arg10[%c0_38, %c2_39, %c0_40] : memref<1x10x32xf32, #tpu.memory_space<vmem>>, vector<1x8x32xf32>
    %44 = vector.shape_cast %43 : vector<1x8x32xf32> to vector<8x32xf32>
    %45 = tpu.concatenate %40, %42, %44 in 1 : vector<8x32xf32>, vector<8x32xf32>, vector<8x32xf32> -> vector<8x96xf32>
    %46 = arith.truncf %45 : vector<8x96xf32> to vector<8x96xbf16>
    %c1_41 = arith.constant 1 : index
    %c0_42 = arith.constant 0 : index
    %c0_43 = arith.constant 0 : index
    %47 = vector.load %arg4[%c1_41, %c0_42, %c0_43] : memref<2x96x64xbf16, #tpu.memory_space<vmem>>, vector<1x96x64xbf16>
    %48 = vector.shape_cast %47 : vector<1x96x64xbf16> to vector<96x64xbf16>
    %cst_44 = arith.constant dense<0.000000e+00> : vector<8x64xf32>
    %49 = tpu.matmul %46, %48, %cst_44 {dimension_numbers = #tpu.dot_dimension_numbers<[1], [0], [0], [1], [0, 0, 1, 1], [], []>} : vector<8x96xbf16>, vector<96x64xbf16>, vector<8x64xf32> -> vector<8x64xf32>
    %c1_45 = arith.constant 1 : index
    %c0_46 = arith.constant 0 : index
    %c0_47 = arith.constant 0 : index
    %50 = vector.load %arg5[%c1_45, %c0_46, %c0_47] : memref<2x1x64xf32, #tpu.memory_space<vmem>>, vector<1x1x64xf32>
    %51 = vector.shape_cast %50 : vector<1x1x64xf32> to vector<1x64xf32>
    %52 = vector.broadcast %51 : vector<1x64xf32> to vector<8x64xf32>
    %53 = arith.addf %49, %52 : vector<8x64xf32>
    %54 = vector.extract_strided_slice %53 {offsets = [0, 0], sizes = [8, 32], strides = [1, 1]} : vector<8x64xf32> to vector<8x32xf32>
    %55 = vector.extract_strided_slice %53 {offsets = [0, 32], sizes = [8, 32], strides = [1, 1]} : vector<8x64xf32> to vector<8x32xf32>
    %56 = arith.negf %55 : vector<8x32xf32>
    %57 = math.exp %56 : vector<8x32xf32>
    %cst_48 = arith.constant 1.000000e+00 : f32
    %58 = vector.broadcast %cst_48 : f32 to vector<8x32xf32>
    %59 = arith.addf %58, %57 : vector<8x32xf32>
    %60 = arith.divf %58, %59 : vector<8x32xf32>
    %61 = arith.mulf %54, %60 : vector<8x32xf32>
    %62 = arith.addf %61, %36 : vector<8x32xf32>
    %cst_49 = arith.constant 0.707106769 : f32
    %63 = vector.broadcast %cst_49 : f32 to vector<8x32xf32>
    %64 = arith.mulf %62, %63 : vector<8x32xf32>
    %65 = arith.truncf %64 : vector<8x32xf32> to vector<8x32xbf16>
    %c0_50 = arith.constant 0 : index
    %c0_51 = arith.constant 0 : index
    %66 = vector.load %arg6[%c0_50, %c0_51] : memref<32x32xbf16, #tpu.memory_space<vmem>>, vector<32x32xbf16>
    %cst_52 = arith.constant dense<0.000000e+00> : vector<8x32xf32>
    %67 = tpu.matmul %65, %66, %cst_52 {dimension_numbers = #tpu.dot_dimension_numbers<[1], [0], [0], [1], [0, 0, 1, 1], [], []>} : vector<8x32xbf16>, vector<32x32xbf16>, vector<8x32xf32> -> vector<8x32xf32>
    %c0_53 = arith.constant 0 : index
    %c0_54 = arith.constant 0 : index
    %68 = vector.load %arg7[%c0_53, %c0_54] : memref<1x32xf32, #tpu.memory_space<vmem>>, vector<1x32xf32>
    %69 = vector.broadcast %68 : vector<1x32xf32> to vector<8x32xf32>
    %70 = arith.addf %67, %69 : vector<8x32xf32>
    %71 = arith.extf %1 : vector<8x32xbf16> to vector<8x32xf32>
    %72 = arith.addf %70, %71 : vector<8x32xf32>
    %cst_55 = arith.constant 0.707106769 : f32
    %73 = vector.broadcast %cst_55 : f32 to vector<8x32xf32>
    %74 = arith.mulf %72, %73 : vector<8x32xf32>
    %75 = vector.shape_cast %70 : vector<8x32xf32> to vector<1x8x32xf32>
    %c0_56 = arith.constant 0 : index
    %c0_57 = arith.constant 0 : index
    %c0_58 = arith.constant 0 : index
    %76 = vector.load %arg8[%c0_56, %c0_57, %c0_58] : memref<1x8x32xf32, #tpu.memory_space<vmem>>, vector<1x8x32xf32>
    tpu.vector_store %arg8[%c0_56, %c0_57, %c0_58], %75 {strides = array<i32>} : memref<1x8x32xf32, #tpu.memory_space<vmem>>, vector<1x8x32xf32>,
    %77 = vector.shape_cast %74 : vector<8x32xf32> to vector<1x8x32xf32>
    %c0_59 = arith.constant 0 : index
    %c0_60 = arith.constant 0 : index
    %c0_61 = arith.constant 0 : index
    %78 = vector.load %arg9[%c0_59, %c0_60, %c0_61] : memref<1x8x32xf32, #tpu.memory_space<vmem>>, vector<1x8x32xf32>
    tpu.vector_store %arg9[%c0_59, %c0_60, %c0_61], %77 {strides = array<i32>} : memref<1x8x32xf32, #tpu.memory_space<vmem>>, vector<1x8x32xf32>,
    return
  }
  func.func @transform_0(%arg0: i32) -> (i32, i32, i32) {
    %c0_i32 = arith.constant 0 : i32
    %c0_i32_0 = arith.constant 0 : i32
    %c0_i32_1 = arith.constant 0 : i32
    return %arg0, %c0_i32, %c0_i32_0 : i32, i32, i32
  }
  func.func @transform_1(%arg0: i32) -> (i32, i32) {
    %c0_i32 = arith.constant 0 : i32
    %c0_i32_0 = arith.constant 0 : i32
    %c0_i32_1 = arith.constant 0 : i32
    return %c0_i32, %c0_i32_0 : i32, i32
  }
  func.func @transform_2(%arg0: i32) -> (i32, i32) {
    %c0_i32 = arith.constant 0 : i32
    %c0_i32_0 = arith.constant 0 : i32
    %c0_i32_1 = arith.constant 0 : i32
    return %c0_i32, %c0_i32_0 : i32, i32
  }
  func.func @transform_3(%arg0: i32) -> (i32, i32, i32) {
    %c0_i32 = arith.constant 0 : i32
    %c0_i32_0 = arith.constant 0 : i32
    %c0_i32_1 = arith.constant 0 : i32
    %c0_i32_2 = arith.constant 0 : i32
    return %c0_i32, %c0_i32_0, %c0_i32_1 : i32, i32, i32
  }
  func.func @transform_4(%arg0: i32) -> (i32, i32, i32) {
    %c0_i32 = arith.constant 0 : i32
    %c0_i32_0 = arith.constant 0 : i32
    %c0_i32_1 = arith.constant 0 : i32
    %c0_i32_2 = arith.constant 0 : i32
    return %c0_i32, %c0_i32_0, %c0_i32_1 : i32, i32, i32
  }
  func.func @transform_5(%arg0: i32) -> (i32, i32) {
    %c0_i32 = arith.constant 0 : i32
    %c0_i32_0 = arith.constant 0 : i32
    %c0_i32_1 = arith.constant 0 : i32
    return %c0_i32, %c0_i32_0 : i32, i32
  }
  func.func @transform_6(%arg0: i32) -> (i32, i32) {
    %c0_i32 = arith.constant 0 : i32
    %c0_i32_0 = arith.constant 0 : i32
    %c0_i32_1 = arith.constant 0 : i32
    return %c0_i32, %c0_i32_0 : i32, i32
  }
  func.func @transform_7(%arg0: i32) -> (i32, i32, i32) {
    %c0_i32 = arith.constant 0 : i32
    %c0_i32_0 = arith.constant 0 : i32
    %c0_i32_1 = arith.constant 0 : i32
    return %arg0, %c0_i32, %c0_i32_0 : i32, i32, i32
  }
  func.func @transform_8(%arg0: i32) -> (i32, i32, i32) {
    %c0_i32 = arith.constant 0 : i32
    %c0_i32_0 = arith.constant 0 : i32
    %c0_i32_1 = arith.constant 0 : i32
    return %arg0, %c0_i32, %c0_i32_0 : i32, i32, i32
  }
}

</mosaic_0001>

<llo_original>
// kernel: tpu_custom_call.1
$region0: #{tpu_custom_call.1}
  #allocation0 [shape = 'u32[]', space=smem, size = 0x4, offset = 0x4, fixed_abs, tag = 'smem constant byte address 0x4 - core index']
  #allocation1 [shape = 'u32[144,128]{1,0:T(1,128)}', space=vmem, size = 0x12000, scoped, tag = 'internal scratch']
  #allocation2 [shape = 'f32[1,10,32]{2,1,0:T(8,128)}', space=vmem, size = 0x2000, scoped, tag = 'scratch operand']
  %s0 = inlined_call_operand.vmem [shape: bf16[2,8,32], index: 0, kind: input, shape index: {}]
  %s1 = inlined_call_operand.vmem [shape: bf16[32,32], index: 1, kind: input, shape index: {}]
  %s2 = inlined_call_operand.vmem [shape: f32[1,32], index: 2, kind: input, shape index: {}]
  %s3 = inlined_call_operand.vmem [shape: bf16[2,96,64], index: 3, kind: input, shape index: {}]
  %s4 = inlined_call_operand.vmem [shape: f32[2,1,64], index: 4, kind: input, shape index: {}]
  %s5 = inlined_call_operand.vmem [shape: bf16[32,32], index: 5, kind: input, shape index: {}]
  %s6 = inlined_call_operand.vmem [shape: f32[1,32], index: 6, kind: input, shape index: {}]
  %s7 = inlined_call_operand.hbm [shape: f32[2,8,32], index: 7, kind: output, shape index: {0}]
  %s8 = inlined_call_operand.hbm [shape: f32[2,8,32], index: 8, kind: output, shape index: {1}]
  %9 = xla_tuple %s7, %s8
  %s10 = sld [smem:[#allocation0]]
  $region69: #{tpu_custom_call.1} parent=0
    _
  %s12 = ssub.s32 1, %s10
  %s13 = scalar_select 0, %s12, %s10
  $region1: #{tpu_custom_call.1} parent=0
    #allocation3 [shape = 'u8[8192]{0}', space=vmem, size = 0x2000, scoped, tag = 'output window, operand 0']
    #allocation4 [shape = 's32[2]{0}', space=sflag, size = 0x8, scoped, tag = 'scoped memory for tpu_custom_call.1']
    #allocation5 [shape = 'u8[8192]{0}', space=vmem, size = 0x2000, scoped, tag = 'output window, operand 1']
    #allocation6 [shape = 's32[2]{0}', space=sflag, size = 0x8, scoped, tag = 'scoped memory for tpu_custom_call.1']
    %14 = vsyncpa [#allocation4], 0
    %s15 = scalar_lea.sflag [#allocation4], 1
    %16 = vsyncpa %s15, 0
    %17 = vsyncpa [#allocation6], 0
    %s18 = scalar_lea.sflag [#allocation6], 1
    %19 = vsyncpa %s18, 0
    loop: start=0, step=1, limit=4
    $region2: #{tpu_custom_call.1} parent=1 // loop_pre_header
      _
    $region3: #{tpu_custom_call.1} parent=1 // loop_header
      %s21 = sphi 0, %s25
      %p22 = scmp.ge.s32.totalorder %s21, 4
      %s31 = sphi 0, %s33
      %s34 = sphi 0, %s31
      %s35 = sphi 0, %s34
      %s51 = sphi 0, %s35
      %s55 = sphi 0, %s55
      %s57 = sphi 0, %s55
      %s58 = sphi 0, %s57
      %s72 = sphi 0, %s58
      %s76 = sphi 0, %s76
      %s78 = sphi 0, %s76
      %s79 = sphi 0, %s78
      %s93 = sphi 0, %s79
      %s97 = sphi 0, %s97
      %s99 = sphi 0, %s97
      %s100 = sphi 0, %s99
      %s114 = sphi 0, %s100
      %s118 = sphi 0, %s118
      %s120 = sphi 0, %s118
      %s121 = sphi 0, %s120
      %s135 = sphi 0, %s121
      %s139 = sphi 0, %s139
      %s141 = sphi 0, %s139
      %s142 = sphi 0, %s141
      %s156 = sphi 0, %s142
      %s160 = sphi 0, %s160
      %s162 = sphi 0, %s160
      %s163 = sphi 0, %s162
      %s177 = sphi 0, %s163
      %s183 = sphi 0, %s185
      %s186 = sphi 0, %s183
      %s187 = sphi 0, %s186
      %s203 = sphi 0, %s187
      %s209 = sphi 0, %s211
      %s212 = sphi 0, %s209
      %s213 = sphi 0, %s212
      %s229 = sphi 0, %s213
    $region4: #{tpu_custom_call.1} parent=1 // loop_header_branch
      %24 = sbr.rel (%p22) target = $region8
    $region5: #{tpu_custom_call.1} parent=1 // loop_body
      %s26 = ssub.s32 %s21, 1
      %s27 = ssub.s32 %s21, 2
      %s28 = sadd.s32 %s21, 1
      %s29 = ssub.s32 %s21, %s28
      %p30 = scmp.eq.s32.totalorder %s29, 0
      %s32 = sadd.s32 %s31, 1
      %s33 = scalar_select %p30, %s31, %s32
      %p36 = pneg %p30
      %p37 = scmp.eq.s32.totalorder %s21, 1
      %p38 = por %p36, %p37
      %p39 = scmp.ne.s32.totalorder %s31, %s34
      %p40 = scmp.eq.s32.totalorder %s21, 0
      %p41 = por %p39, %p40
      %p42 = scmp.ne.s32.totalorder %s31, %s34
      %p43 = scmp.eq.s32.totalorder %s26, 1
      %p44 = por %p42, %p43
      %p45 = scmp.ne.s32.totalorder %s34, %s35
      %p46 = scmp.eq.s32.totalorder %s26, 0
      %p47 = por %p45, %p46
      %p48 = scmp.ne.s32.totalorder %s34, %s35
      %p49 = scmp.eq.s32.totalorder %s27, 1
      %p50 = por %p48, %p49
      %p52 = scmp.ne.s32.totalorder %s35, %s51
      %p53 = scmp.eq.s32.totalorder %s27, 0
      %p54 = por %p52, %p53
      %s56 = sadd.s32 %s55, 1
      %p59 = scmp.eq.s32.totalorder %s21, 1
      %p60 = scmp.ne.s32.totalorder %s55, %s57
      %p61 = scmp.eq.s32.totalorder %s21, 0
      %p62 = por %p60, %p61
      %p63 = scmp.ne.s32.totalorder %s55, %s57
      %p64 = scmp.eq.s32.totalorder %s26, 1
      %p65 = por %p63, %p64
      %p66 = scmp.ne.s32.totalorder %s57, %s58
      %p67 = scmp.eq.s32.totalorder %s26, 0
      %p68 = por %p66, %p67
      %p69 = scmp.ne.s32.totalorder %s57, %s58
      %p70 = scmp.eq.s32.totalorder %s27, 1
      %p71 = por %p69, %p70
      %p73 = scmp.ne.s32.totalorder %s58, %s72
      %p74 = scmp.eq.s32.totalorder %s27, 0
      %p75 = por %p73, %p74
      %s77 = sadd.s32 %s76, 1
      %p80 = scmp.eq.s32.totalorder %s21, 1
      %p81 = scmp.ne.s32.totalorder %s76, %s78
      %p82 = scmp.eq.s32.totalorder %s21, 0
      %p83 = por %p81, %p82
      %p84 = scmp.ne.s32.totalorder %s76, %s78
      %p85 = scmp.eq.s32.totalorder %s26, 1
      %p86 = por %p84, %p85
      %p87 = scmp.ne.s32.totalorder %s78, %s79
      %p88 = scmp.eq.s32.totalorder %s26, 0
      %p89 = por %p87, %p88
      %p90 = scmp.ne.s32.totalorder %s78, %s79
      %p91 = scmp.eq.s32.totalorder %s27, 1
      %p92 = por %p90, %p91
      %p94 = scmp.ne.s32.totalorder %s79, %s93
      %p95 = scmp.eq.s32.totalorder %s27, 0
      %p96 = por %p94, %p95
      %s98 = sadd.s32 %s97, 1
      %p101 = scmp.eq.s32.totalorder %s21, 1
      %p102 = scmp.ne.s32.totalorder %s97, %s99
      %p103 = scmp.eq.s32.totalorder %s21, 0
      %p104 = por %p102, %p103
      %p105 = scmp.ne.s32.totalorder %s97, %s99
      %p106 = scmp.eq.s32.totalorder %s26, 1
      %p107 = por %p105, %p106
      %p108 = scmp.ne.s32.totalorder %s99, %s100
      %p109 = scmp.eq.s32.totalorder %s26, 0
      %p110 = por %p108, %p109
      %p111 = scmp.ne.s32.totalorder %s99, %s100
      %p112 = scmp.eq.s32.totalorder %s27, 1
      %p113 = por %p111, %p112
      %p115 = scmp.ne.s32.totalorder %s100, %s114
      %p116 = scmp.eq.s32.totalorder %s27, 0
      %p117 = por %p115, %p116
      %s119 = sadd.s32 %s118, 1
      %p122 = scmp.eq.s32.totalorder %s21, 1
      %p123 = scmp.ne.s32.totalorder %s118, %s120
      %p124 = scmp.eq.s32.totalorder %s21, 0
      %p125 = por %p123, %p124
      %p126 = scmp.ne.s32.totalorder %s118, %s120
      %p127 = scmp.eq.s32.totalorder %s26, 1
      %p128 = por %p126, %p127
      %p129 = scmp.ne.s32.totalorder %s120, %s121
      %p130 = scmp.eq.s32.totalorder %s26, 0
      %p131 = por %p129, %p130
      %p132 = scmp.ne.s32.totalorder %s120, %s121
      %p133 = scmp.eq.s32.totalorder %s27, 1
      %p134 = por %p132, %p133
      %p136 = scmp.ne.s32.totalorder %s121, %s135
      %p137 = scmp.eq.s32.totalorder %s27, 0
      %p138 = por %p136, %p137
      %s140 = sadd.s32 %s139, 1
      %p143 = scmp.eq.s32.totalorder %s21, 1
      %p144 = scmp.ne.s32.totalorder %s139, %s141
      %p145 = scmp.eq.s32.totalorder %s21, 0
      %p146 = por %p144, %p145
      %p147 = scmp.ne.s32.totalorder %s139, %s141
      %p148 = scmp.eq.s32.totalorder %s26, 1
      %p149 = por %p147, %p148
      %p150 = scmp.ne.s32.totalorder %s141, %s142
      %p151 = scmp.eq.s32.totalorder %s26, 0
      %p152 = por %p150, %p151
      %p153 = scmp.ne.s32.totalorder %s141, %s142
      %p154 = scmp.eq.s32.totalorder %s27, 1
      %p155 = por %p153, %p154
      %p157 = scmp.ne.s32.totalorder %s142, %s156
      %p158 = scmp.eq.s32.totalorder %s27, 0
      %p159 = por %p157, %p158
      %s161 = sadd.s32 %s160, 1
      %p164 = scmp.eq.s32.totalorder %s21, 1
      %p165 = scmp.ne.s32.totalorder %s160, %s162
      %p166 = scmp.eq.s32.totalorder %s21, 0
      %p167 = por %p165, %p166
      %p168 = scmp.ne.s32.totalorder %s160, %s162
      %p169 = scmp.eq.s32.totalorder %s26, 1
      %p170 = por %p168, %p169
      %p171 = scmp.ne.s32.totalorder %s162, %s163
      %p172 = scmp.eq.s32.totalorder %s26, 0
      %p173 = por %p171, %p172
      %p174 = scmp.ne.s32.totalorder %s162, %s163
      %p175 = scmp.eq.s32.totalorder %s27, 1
      %p176 = por %p174, %p175
      %p178 = scmp.ne.s32.totalorder %s163, %s177
      %p179 = scmp.eq.s32.totalorder %s27, 0
      %p180 = por %p178, %p179
      %s181 = ssub.s32 %s21, %s28
      %p182 = scmp.eq.s32.totalorder %s181, 0
      %s184 = sadd.s32 %s183, 1
      %s185 = scalar_select %p182, %s183, %s184
      %p188 = pneg %p182
      %p189 = scmp.eq.s32.totalorder %s21, 1
      %p190 = por %p188, %p189
      %p191 = scmp.ne.s32.totalorder %s183, %s186
      %p192 = scmp.eq.s32.totalorder %s21, 0
      %p193 = por %p191, %p192
      %p194 = scmp.ne.s32.totalorder %s183, %s186
      %p195 = scmp.eq.s32.totalorder %s26, 1
      %p196 = por %p194, %p195
      %p197 = scmp.ne.s32.totalorder %s186, %s187
      %p198 = scmp.eq.s32.totalorder %s26, 0
      %p199 = por %p197, %p198
      %p200 = scmp.ne.s32.totalorder %s186, %s187
      %p201 = scmp.eq.s32.totalorder %s27, 1
      %p202 = por %p200, %p201
      %p204 = scmp.ne.s32.totalorder %s187, %s203
      %p205 = scmp.eq.s32.totalorder %s27, 0
      %p206 = por %p204, %p205
      %s207 = ssub.s32 %s21, %s28
      %p208 = scmp.eq.s32.totalorder %s207, 0
      %s210 = sadd.s32 %s209, 1
      %s211 = scalar_select %p208, %s209, %s210
      %p214 = pneg %p208
      %p215 = scmp.eq.s32.totalorder %s21, 1
      %p216 = por %p214, %p215
      %p217 = scmp.ne.s32.totalorder %s209, %s212
      %p218 = scmp.eq.s32.totalorder %s21, 0
      %p219 = por %p217, %p218
      %p220 = scmp.ne.s32.totalorder %s209, %s212
      %p221 = scmp.eq.s32.totalorder %s26, 1
      %p222 = por %p220, %p221
      %p223 = scmp.ne.s32.totalorder %s212, %s213
      %p224 = scmp.eq.s32.totalorder %s26, 0
      %p225 = por %p223, %p224
      %p226 = scmp.ne.s32.totalorder %s212, %s213
      %p227 = scmp.eq.s32.totalorder %s27, 1
      %p228 = por %p226, %p227
      %p230 = scmp.ne.s32.totalorder %s213, %s229
      %p231 = scmp.eq.s32.totalorder %s27, 0
      %p232 = por %p230, %p231
      %p233 = scmp.le.s32.totalorder 1, %s21
      %p234 = scmp.lt.s32.totalorder %s21, 3
      %p235 = pnand %p233, %p234
      %p236 = pneg %p235
      // Predicated region
      $region9: #{tpu_custom_call.1} parent=5 // pred_check
        _
      $region10: #{tpu_custom_call.1} parent=5 // pred_check_branch
        %238 = sbr.rel (%p235) target = $region12
      $region11: #{tpu_custom_call.1} parent=5 // pred_region
        %s239 = ssub.s32 %s21, 1
        // Predicated region
        $region13: #{tpu_custom_call.1} parent=11 // pred_check
          %p240 = pneg %p68
        $region14: #{tpu_custom_call.1} parent=11 // pred_check_branch
          %242 = sbr.rel (%p240) target = $region16
        $region15: #{tpu_custom_call.1} parent=11 // pred_region
          _
        $region16: #{tpu_custom_call.1} parent=11 // pred_fallthru
          _
        // Predicated region
        $region17: #{tpu_custom_call.1} parent=11 // pred_check
          %p243 = pneg %p89
        $region18: #{tpu_custom_call.1} parent=11 // pred_check_branch
          %245 = sbr.rel (%p243) target = $region20
        $region19: #{tpu_custom_call.1} parent=11 // pred_region
          _
        $region20: #{tpu_custom_call.1} parent=11 // pred_fallthru
          _
        // Predicated region
        $region21: #{tpu_custom_call.1} parent=11 // pred_check
          %p246 = pneg %p110
        $region22: #{tpu_custom_call.1} parent=11 // pred_check_branch
          %248 = sbr.rel (%p246) target = $region24
        $region23: #{tpu_custom_call.1} parent=11 // pred_region
          _
        $region24: #{tpu_custom_call.1} parent=11 // pred_fallthru
          _
        // Predicated region
        $region25: #{tpu_custom_call.1} parent=11 // pred_check
          %p249 = pneg %p131
        $region26: #{tpu_custom_call.1} parent=11 // pred_check_branch
          %251 = sbr.rel (%p249) target = $region28
        $region27: #{tpu_custom_call.1} parent=11 // pred_region
          _
        $region28: #{tpu_custom_call.1} parent=11 // pred_fallthru
          _
        // Predicated region
        $region29: #{tpu_custom_call.1} parent=11 // pred_check
          %p252 = pneg %p152
        $region30: #{tpu_custom_call.1} parent=11 // pred_check_branch
          %254 = sbr.rel (%p252) target = $region32
        $region31: #{tpu_custom_call.1} parent=11 // pred_region
          _
        $region32: #{tpu_custom_call.1} parent=11 // pred_fallthru
          _
        // Predicated region
        $region33: #{tpu_custom_call.1} parent=11 // pred_check
          %p255 = pneg %p173
        $region34: #{tpu_custom_call.1} parent=11 // pred_check_branch
          %257 = sbr.rel (%p255) target = $region36
        $region35: #{tpu_custom_call.1} parent=11 // pred_region
          _
        $region36: #{tpu_custom_call.1} parent=11 // pred_fallthru
          _
      $region12: #{tpu_custom_call.1} parent=5 // pred_fallthru
        _
      %p258 = scmp.lt.s32.totalorder %s21, 2
      // Predicated region
      $region37: #{tpu_custom_call.1} parent=5 // pred_check
        %p259 = pneg %p258
      $region38: #{tpu_custom_call.1} parent=5 // pred_check_branch
        %261 = sbr.rel (%p259) target = $region40
      $region39: #{tpu_custom_call.1} parent=5 // pred_region
        // Predicated region
        $region41: #{tpu_custom_call.1} parent=39 // pred_check
          %p262 = pneg %p41
        $region42: #{tpu_custom_call.1} parent=39 // pred_check_branch
          %264 = sbr.rel (%p262) target = $region44
        $region43: #{tpu_custom_call.1} parent=39 // pred_region
          %p265 = scmp.lt.s32.totalorder %s21, 1
          %s266 = scalar_select %p265, %s21, 1
          %s267 = smul.addr %s266, 4
          %s268 = scalar_lea.vmem %s0, %s267
        $region44: #{tpu_custom_call.1} parent=39 // pred_fallthru
          _
      $region40: #{tpu_custom_call.1} parent=5 // pred_fallthru
        _
      %p269 = scmp.le.s32.totalorder 1, %s21
      %p270 = scmp.lt.s32.totalorder %s21, 3
      %p271 = pnand %p269, %p270
      %p272 = pneg %p271
      // Predicated region
      $region45: #{tpu_custom_call.1} parent=5 // pred_check
        _
      $region46: #{tpu_custom_call.1} parent=5 // pred_check_branch
        %274 = sbr.rel (%p271) target = $region48
      $region47: #{tpu_custom_call.1} parent=5 // pred_region
        %s275 = ssub.s32 %s21, 1
        %p276 = scmp.lt.s32.totalorder %s26, 1
        %s277 = scalar_select %p276, %s26, 1
        %s278 = smul.addr %s277, 4
        %s279 = scalar_lea.vmem %s0, %s278
        %p280 = pneg %p47
        %p281 = pneg %p44
        %p282 = pneg %p68
        %p283 = pneg %p65
        %p284 = pneg %p89
        %p285 = pneg %p86
        %p286 = pneg %p110
        %p287 = pneg %p107
        %p288 = pneg %p131
        %p289 = pneg %p128
        %p290 = pneg %p152
        %p291 = pneg %p149
        %p292 = pneg %p173
        %p293 = pneg %p170
        %p294 = pneg %p199
        %p295 = pneg %p196
        %s296 = sand.u32 %s186, 1
        %s297 = scalar_lea.sflag [#allocation4], %s296
        %s298 = sand.u32 %s186, 1
        %s299 = smul.addr %s298, 8
        %s300 = scalar_lea.vmem [#allocation3], %s299
        %p301 = pneg %p225
        %p302 = pneg %p222
        %s303 = sand.u32 %s212, 1
        %s304 = scalar_lea.sflag [#allocation6], %s303
        %s305 = sand.u32 %s212, 1
        %s306 = smul.addr %s305, 8
        %s307 = scalar_lea.vmem [#allocation5], %s306
        %p308 = scmp.lt.s32.totalorder %s26, 1
        %s309 = scalar_select %p308, %s26, 1
        %s310 = smul.addr %s309, 4
        %s311 = scalar_lea.vmem %s0, %s310
        %v313 = vld [vmem:[%s311] sm:$0xf]
        %v314 = vld [vmem:[%s1] sm:$0xf]
        %v315 = vld [vmem:[%s1 + $0x4] sm:$0xf]
        %v316 = vld [vmem:[%s1 + $0x8] sm:$0xf]
        %v317 = vld [vmem:[%s1 + $0xc] sm:$0xf]
        %v318 = vld [vmem:[%s2] sm:$0x1]
        %v320 = vlaneseq
        %v321 = vshrl.u32 %v320, 7
        %v322 = vsub.s32 0, %v321
        %v323 = vrot.slane %v318, %v322
        %v329 = vunpack.c.l.b16 %v314
        %v330 = vunpack.c.l.b16 %v315
        %v331 = vunpack.c.l.b16 %v316
        %v332 = vunpack.c.l.b16 %v317
        %v333 = vpack.c.b16 %v330, %v329
        %v334 = vpack.c.b16 %v332, %v331
        %vm337 = vcmask 261120
        %v339 = vsel %vm337, %v313, 0
        %341 = vmatprep.subr.bf16.mxu0 0
        %342 = vmatpush1.bf16.msra.mxu0 0
        %343 = vmatprep.subr.bf16.mxu0 0
        %344 = vmatpush1.bf16.msra.mxu0 0
        %345 = vmatprep.subr.bf16.mxu0 0
        %346 = vmatpush1.bf16.msra.mxu0 0
        %347 = vmatprep.subr.bf16.mxu0 0
        %348 = vmatpush1.bf16.msra.mxu0 0
        %349 = vmatprep.subr.bf16.mxu0 0
        %350 = vmatpush1.bf16.msra.mxu0 0
        %351 = vmatprep.subr.bf16.mxu0 0
        %352 = vmatpush1.bf16.msra.mxu0 0
        %353 = vmatprep.subr.bf16.mxu0 0
        %354 = vmatpush1.bf16.msra.mxu0 %v334
        %355 = vmatprep.subr.bf16.mxu0 0
        %356 = vmatpush1.bf16.msra.mxu0 %v333
        %357 = vmatprep.subr.bf16.mxu0 0
        %358 = vmatpush2.bf16.msra.mxu0 0
        %359 = vmatprep.subr.bf16.mxu0 0
        %360 = vmatpush2.bf16.msra.mxu0 0
        %361 = vmatprep.subr.bf16.mxu0 0
        %362 = vmatpush2.bf16.msra.mxu0 0
        %363 = vmatprep.subr.bf16.mxu0 0
        %364 = vmatpush2.bf16.msra.mxu0 0
        %365 = vmatprep.subr.bf16.mxu0 0
        %366 = vmatpush2.bf16.msra.mxu0 0
        %367 = vmatprep.subr.bf16.mxu0 0
        %368 = vmatpush2.bf16.msra.mxu0 0
        %369 = vmatprep.subr.bf16.mxu0 0
        %370 = vmatpush2.bf16.msra.mxu0 0
        %371 = vmatprep.subr.bf16.mxu0 0
        %372 = vmatpush2.bf16.msra.mxu0 0
        %373 = vmatprep.mubr.bf16.mxu0 0
        %374 = vmatmul.mubr.bf16.gmra.mxu0 %v339
        %v375 = vpop.f32.mrf.mxu0
        %v376 = vadd.f32 %v323, %v375
        %v377 = vpop.f32.mrf.mxu0
        %v378 = vpop.f32.mrf.mxu0
        %v379 = vpop.f32.mrf.mxu0
        %380 = vdwg.mxu0
        %381 = vst.msk [vmem:[#allocation2] sm:$0xff] %vm337, 0.0
        %vm382 = vcmask 254976
        %383 = vst.msk [vmem:[#allocation2 + $0x8] sm:$0x3] %vm382, 0.0
        %384 = vst.msk [vmem:[#allocation2 + $0x1] sm:$0xff] %vm337, %v376
        %v385 = vld [vmem:[#allocation2] sm:$0xff]
        %v386 = vld [vmem:[#allocation2 + $0x1] sm:$0xff]
        %v387 = vld [vmem:[#allocation2 + $0x2] sm:$0xff]
        %389 = vrot.lane.b32.xlu0 %v386, 32
        %v390 = vpop.permute.xlu0 %389
        %393 = vrot.lane.b32.xlu0 %v387, 64
        %v394 = vpop.permute.xlu0 %393
        %v396 = vsel %vm337, %v385, %v390
        %vm397 = vcmask 523264
        %v398 = vsel %vm397, %v396, %v394
        %v399 = vpack.c.bf16 %v398, %v398
        %v400 = vld [vmem:[%s3] sm:$0xf]
        %v401 = vld [vmem:[%s3 + $0x4] sm:$0xf]
        %v402 = vld [vmem:[%s3 + $0x8] sm:$0xf]
        %v403 = vld [vmem:[%s3 + $0xc] sm:$0xf]
        %v404 = vld [vmem:[%s3 + $0x10] sm:$0xf]
        %v405 = vld [vmem:[%s3 + $0x14] sm:$0xf]
        %v406 = vld [vmem:[%s3 + $0x18] sm:$0xf]
        %v407 = vld [vmem:[%s3 + $0x1c] sm:$0xf]
        %v408 = vld [vmem:[%s3 + $0x20] sm:$0xf]
        %v409 = vld [vmem:[%s3 + $0x24] sm:$0xf]
        %v410 = vld [vmem:[%s3 + $0x28] sm:$0xf]
        %v411 = vld [vmem:[%s3 + $0x2c] sm:$0xf]
        %v412 = vld [vmem:[%s4] sm:$0x1]
        %v414 = vlaneseq
        %v415 = vshrl.u32 %v414, 7
        %v416 = vsub.s32 0, %v415
        %v417 = vrot.slane %v412, %v416
        %v431 = vunpack.c.l.b16 %v400
        %v432 = vunpack.c.l.b16 %v401
        %v433 = vunpack.c.l.b16 %v402
        %v434 = vunpack.c.l.b16 %v403
        %v435 = vunpack.c.l.b16 %v404
        %v436 = vunpack.c.l.b16 %v405
        %v437 = vunpack.c.l.b16 %v406
        %v438 = vunpack.c.l.b16 %v407
        %v439 = vunpack.c.l.b16 %v408
        %v440 = vunpack.c.l.b16 %v409
        %v441 = vunpack.c.l.b16 %v410
        %v442 = vunpack.c.l.b16 %v411
        %v443 = vpack.c.b16 %v432, %v431
        %v444 = vpack.c.b16 %v434, %v433
        %v445 = vpack.c.b16 %v436, %v435
        %v446 = vpack.c.b16 %v438, %v437
        %v447 = vpack.c.b16 %v440, %v439
        %v448 = vpack.c.b16 %v442, %v441
        %vm455 = vcmask 785408
        %v457 = vsel %vm455, %v399, 0
        %459 = vmatprep.subr.bf16.mxu0 0
        %460 = vmatpush1.bf16.msra.mxu0 0
        %461 = vmatprep.subr.bf16.mxu0 0
        %462 = vmatpush1.bf16.msra.mxu0 0
        %463 = vmatprep.subr.bf16.mxu0 0
        %464 = vmatpush1.bf16.msra.mxu0 %v448
        %465 = vmatprep.subr.bf16.mxu0 0
        %466 = vmatpush1.bf16.msra.mxu0 %v447
        %467 = vmatprep.subr.bf16.mxu0 0
        %468 = vmatpush1.bf16.msra.mxu0 %v446
        %469 = vmatprep.subr.bf16.mxu0 0
        %470 = vmatpush1.bf16.msra.mxu0 %v445
        %471 = vmatprep.subr.bf16.mxu0 0
        %472 = vmatpush1.bf16.msra.mxu0 %v444
        %473 = vmatprep.subr.bf16.mxu0 0
        %474 = vmatpush1.bf16.msra.mxu0 %v443
        %475 = vmatprep.subr.bf16.mxu0 0
        %476 = vmatpush2.bf16.msra.mxu0 0
        %477 = vmatprep.subr.bf16.mxu0 0
        %478 = vmatpush2.bf16.msra.mxu0 0
        %479 = vmatprep.subr.bf16.mxu0 0
        %480 = vmatpush2.bf16.msra.mxu0 0
        %481 = vmatprep.subr.bf16.mxu0 0
        %482 = vmatpush2.bf16.msra.mxu0 0
        %483 = vmatprep.subr.bf16.mxu0 0
        %484 = vmatpush2.bf16.msra.mxu0 0
        %485 = vmatprep.subr.bf16.mxu0 0
        %486 = vmatpush2.bf16.msra.mxu0 0
        %487 = vmatprep.subr.bf16.mxu0 0
        %488 = vmatpush2.bf16.msra.mxu0 0
        %489 = vmatprep.subr.bf16.mxu0 0
        %490 = vmatpush2.bf16.msra.mxu0 0
        %491 = vmatprep.mubr.bf16.mxu0 0
        %492 = vmatmul.mubr.bf16.gmra.mxu0 %v457
        %v493 = vpop.f32.mrf.mxu0
        %v494 = vadd.f32 %v417, %v493
        %v495 = vpop.f32.mrf.mxu0
        %v496 = vpop.f32.mrf.mxu0
        %v497 = vpop.f32.mrf.mxu0
        %498 = vdwg.mxu0
        %v499 = vxor.u32 %v494, 2147483648
        %v500 = vmul.f32 %v499, 1.442695
        %v501 = vpow.pop %v500
        %v502 = vadd.f32 %v501, 1.0
        %v503 = vrcp.pop %v502
        %v504 = vmul.f32 1.0, %v503
        %506 = vrot.lane.b32.xlu0 %v504, 96
        %v507 = vpop.permute.xlu0 %506
        %v509 = vmul.f32 %v494, %v507
        %v510 = vadd.f32 %v509, %v376
        %v511 = vmul.f32 %v510, 0.70710677
        %512 = vst.msk [vmem:[#allocation2 + $0x1] sm:$0xff] %vm337, %v511
        %v513 = vld [vmem:[#allocation2] sm:$0xff]
        %v514 = vld [vmem:[#allocation2 + $0x1] sm:$0xff]
        %v515 = vld [vmem:[#allocation2 + $0x2] sm:$0xff]
        %517 = vrot.lane.b32.xlu0 %v514, 32
        %v518 = vpop.permute.xlu0 %517
        %521 = vrot.lane.b32.xlu0 %v515, 64
        %v522 = vpop.permute.xlu0 %521
        %v524 = vsel %vm337, %v513, %v518
        %v525 = vsel %vm397, %v524, %v522
        %v526 = vpack.c.bf16 %v525, %v525
        %s527 = scalar_lea.vmem %s3, 48
        %v528 = vld [vmem:[%s527] sm:$0xf]
        %v529 = vld [vmem:[%s527 + $0x4] sm:$0xf]
        %v530 = vld [vmem:[%s527 + $0x8] sm:$0xf]
        %v531 = vld [vmem:[%s527 + $0xc] sm:$0xf]
        %v532 = vld [vmem:[%s527 + $0x10] sm:$0xf]
        %v533 = vld [vmem:[%s527 + $0x14] sm:$0xf]
        %v534 = vld [vmem:[%s527 + $0x18] sm:$0xf]
        %v535 = vld [vmem:[%s527 + $0x1c] sm:$0xf]
        %v536 = vld [vmem:[%s527 + $0x20] sm:$0xf]
        %v537 = vld [vmem:[%s527 + $0x24] sm:$0xf]
        %v538 = vld [vmem:[%s527 + $0x28] sm:$0xf]
        %v539 = vld [vmem:[%s527 + $0x2c] sm:$0xf]
        %s540 = scalar_lea.vmem %s4, 1
        %v541 = vld [vmem:[%s540] sm:$0x1]
        %v543 = vlaneseq
        %v544 = vshrl.u32 %v543, 7
        %v545 = vsub.s32 0, %v544
        %v546 = vrot.slane %v541, %v545
        %v560 = vunpack.c.l.b16 %v528
        %v561 = vunpack.c.l.b16 %v529
        %v562 = vunpack.c.l.b16 %v530
        %v563 = vunpack.c.l.b16 %v531
        %v564 = vunpack.c.l.b16 %v532
        %v565 = vunpack.c.l.b16 %v533
        %v566 = vunpack.c.l.b16 %v534
        %v567 = vunpack.c.l.b16 %v535
        %v568 = vunpack.c.l.b16 %v536
        %v569 = vunpack.c.l.b16 %v537
        %v570 = vunpack.c.l.b16 %v538
        %v571 = vunpack.c.l.b16 %v539
        %v572 = vpack.c.b16 %v561, %v560
        %v573 = vpack.c.b16 %v563, %v562
        %v574 = vpack.c.b16 %v565, %v564
        %v575 = vpack.c.b16 %v567, %v566
        %v576 = vpack.c.b16 %v569, %v568
        %v577 = vpack.c.b16 %v571, %v570
        %v585 = vsel %vm455, %v526, 0
        %587 = vmatprep.subr.bf16.mxu0 0
        %588 = vmatpush1.bf16.msra.mxu0 0
        %589 = vmatprep.subr.bf16.mxu0 0
        %590 = vmatpush1.bf16.msra.mxu0 0
        %591 = vmatprep.subr.bf16.mxu0 0
        %592 = vmatpush1.bf16.msra.mxu0 %v577
        %593 = vmatprep.subr.bf16.mxu0 0
        %594 = vmatpush1.bf16.msra.mxu0 %v576
        %595 = vmatprep.subr.bf16.mxu0 0
        %596 = vmatpush1.bf16.msra.mxu0 %v575
        %597 = vmatprep.subr.bf16.mxu0 0
        %598 = vmatpush1.bf16.msra.mxu0 %v574
        %599 = vmatprep.subr.bf16.mxu0 0
        %600 = vmatpush1.bf16.msra.mxu0 %v573
        %601 = vmatprep.subr.bf16.mxu0 0
        %602 = vmatpush1.bf16.msra.mxu0 %v572
        %603 = vmatprep.subr.bf16.mxu0 0
        %604 = vmatpush2.bf16.msra.mxu0 0
        %605 = vmatprep.subr.bf16.mxu0 0
        %606 = vmatpush2.bf16.msra.mxu0 0
        %607 = vmatprep.subr.bf16.mxu0 0
        %608 = vmatpush2.bf16.msra.mxu0 0
        %609 = vmatprep.subr.bf16.mxu0 0
        %610 = vmatpush2.bf16.msra.mxu0 0
        %611 = vmatprep.subr.bf16.mxu0 0
        %612 = vmatpush2.bf16.msra.mxu0 0
        %613 = vmatprep.subr.bf16.mxu0 0
        %614 = vmatpush2.bf16.msra.mxu0 0
        %615 = vmatprep.subr.bf16.mxu0 0
        %616 = vmatpush2.bf16.msra.mxu0 0
        %617 = vmatprep.subr.bf16.mxu0 0
        %618 = vmatpush2.bf16.msra.mxu0 0
        %619 = vmatprep.mubr.bf16.mxu0 0
        %620 = vmatmul.mubr.bf16.gmra.mxu0 %v585
        %v621 = vpop.f32.mrf.mxu0
        %v622 = vadd.f32 %v546, %v621
        %v623 = vpop.f32.mrf.mxu0
        %v624 = vpop.f32.mrf.mxu0
        %v625 = vpop.f32.mrf.mxu0
        %626 = vdwg.mxu0
        %v627 = vxor.u32 %v622, 2147483648
        %v628 = vmul.f32 %v627, 1.442695
        %v629 = vpow.pop %v628
        %v630 = vadd.f32 %v629, 1.0
        %v631 = vrcp.pop %v630
        %v632 = vmul.f32 1.0, %v631
        %634 = vrot.lane.b32.xlu0 %v632, 96
        %v635 = vpop.permute.xlu0 %634
        %v637 = vmul.f32 %v622, %v635
        %v638 = vadd.f32 %v637, %v511
        %v639 = vmul.f32 %v638, 0.70710677
        %v640 = vpack.c.bf16 %v639, %v639
        %v641 = vld [vmem:[%s5] sm:$0xf]
        %v642 = vld [vmem:[%s5 + $0x4] sm:$0xf]
        %v643 = vld [vmem:[%s5 + $0x8] sm:$0xf]
        %v644 = vld [vmem:[%s5 + $0xc] sm:$0xf]
        %v645 = vld [vmem:[%s6] sm:$0x1]
        %v647 = vlaneseq
        %v648 = vshrl.u32 %v647, 7
        %v649 = vsub.s32 0, %v648
        %v650 = vrot.slane %v645, %v649
        %v656 = vunpack.c.l.b16 %v641
        %v657 = vunpack.c.l.b16 %v642
        %v658 = vunpack.c.l.b16 %v643
        %v659 = vunpack.c.l.b16 %v644
        %v660 = vpack.c.b16 %v657, %v656
        %v661 = vpack.c.b16 %v659, %v658
        %v665 = vsel %vm337, %v640, 0
        %667 = vmatprep.subr.bf16.mxu0 0
        %668 = vmatpush1.bf16.msra.mxu0 0
        %669 = vmatprep.subr.bf16.mxu0 0
        %670 = vmatpush1.bf16.msra.mxu0 0
        %671 = vmatprep.subr.bf16.mxu0 0
        %672 = vmatpush1.bf16.msra.mxu0 0
        %673 = vmatprep.subr.bf16.mxu0 0
        %674 = vmatpush1.bf16.msra.mxu0 0
        %675 = vmatprep.subr.bf16.mxu0 0
        %676 = vmatpush1.bf16.msra.mxu0 0
        %677 = vmatprep.subr.bf16.mxu0 0
        %678 = vmatpush1.bf16.msra.mxu0 0
        %679 = vmatprep.subr.bf16.mxu0 0
        %680 = vmatpush1.bf16.msra.mxu0 %v661
        %681 = vmatprep.subr.bf16.mxu0 0
        %682 = vmatpush1.bf16.msra.mxu0 %v660
        %683 = vmatprep.subr.bf16.mxu0 0
        %684 = vmatpush2.bf16.msra.mxu0 0
        %685 = vmatprep.subr.bf16.mxu0 0
        %686 = vmatpush2.bf16.msra.mxu0 0
        %687 = vmatprep.subr.bf16.mxu0 0
        %688 = vmatpush2.bf16.msra.mxu0 0
        %689 = vmatprep.subr.bf16.mxu0 0
        %690 = vmatpush2.bf16.msra.mxu0 0
        %691 = vmatprep.subr.bf16.mxu0 0
        %692 = vmatpush2.bf16.msra.mxu0 0
        %693 = vmatprep.subr.bf16.mxu0 0
        %694 = vmatpush2.bf16.msra.mxu0 0
        %695 = vmatprep.subr.bf16.mxu0 0
        %696 = vmatpush2.bf16.msra.mxu0 0
        %697 = vmatprep.subr.bf16.mxu0 0
        %698 = vmatpush2.bf16.msra.mxu0 0
        %699 = vmatprep.mubr.bf16.mxu0 0
        %700 = vmatmul.mubr.bf16.gmra.mxu0 %v665
        %v701 = vpop.f32.mrf.mxu0
        %v702 = vadd.f32 %v650, %v701
        %v703 = vpop.f32.mrf.mxu0
        %v704 = vpop.f32.mrf.mxu0
        %v705 = vpop.f32.mrf.mxu0
        %706 = vdwg.mxu0
        %v707 = vunpack.c.l.bf16 %v313
        %v708 = vadd.f32 %v702, %v707
        %v709 = vmul.f32 %v708, 0.70710677
        %710 = vst.msk [vmem:[%s300] sm:$0xff] %vm337, %v702
        %711 = vst.msk [vmem:[%s307] sm:$0xff] %vm337, %v709
        %s712 = sand.u32 %s186, 1
        %s713 = scalar_lea.sflag [#allocation4], %s712
        %s714 = sand.u32 %s186, 1
        %s715 = smul.addr %s714, 8
        %s716 = scalar_lea.vmem [#allocation3], %s715
        %s717 = sand.u32 %s212, 1
        %s718 = scalar_lea.sflag [#allocation6], %s717
        %s719 = sand.u32 %s212, 1
        %s720 = smul.addr %s719, 8
        %s721 = scalar_lea.vmem [#allocation5], %s720
        // Predicated region
        $region49: #{tpu_custom_call.1} parent=47 // pred_check
          %p722 = pneg %p196
        $region50: #{tpu_custom_call.1} parent=47 // pred_check_branch
          %724 = sbr.rel (%p722) target = $region52
        $region51: #{tpu_custom_call.1} parent=47 // pred_region
          %s726 = ssub.s32 128, 128
          %727 = vsyncadd %s713, %s726
          %s728 = smul.addr %s26, 128
          %s729 = scalar_lea.hbm %s7, %s728
          %s731 = sshll.u32 %s716, 4
          %s732 = int_to_ptr.vmem [resolvable:$true] %s731
          %734 = dma.vmem_to_hbm [thread:$0]  %s732, 128, %s729, %s713
        $region52: #{tpu_custom_call.1} parent=47 // pred_fallthru
          _
        // Predicated region
        $region53: #{tpu_custom_call.1} parent=47 // pred_check
          %p735 = pneg %p222
        $region54: #{tpu_custom_call.1} parent=47 // pred_check_branch
          %737 = sbr.rel (%p735) target = $region56
        $region55: #{tpu_custom_call.1} parent=47 // pred_region
          %s739 = ssub.s32 128, 128
          %740 = vsyncadd %s718, %s739
          %s741 = smul.addr %s26, 128
          %s742 = scalar_lea.hbm %s8, %s741
          %s744 = sshll.u32 %s721, 4
          %s745 = int_to_ptr.vmem [resolvable:$true] %s744
          %747 = dma.vmem_to_hbm [thread:$0]  %s745, 128, %s742, %s718
        $region56: #{tpu_custom_call.1} parent=47 // pred_fallthru
          _
      $region48: #{tpu_custom_call.1} parent=5 // pred_fallthru
        _
      %p748 = scmp.le.s32.totalorder 2, %s21
      // Predicated region
      $region57: #{tpu_custom_call.1} parent=5 // pred_check
        %p749 = pneg %p748
      $region58: #{tpu_custom_call.1} parent=5 // pred_check_branch
        %751 = sbr.rel (%p749) target = $region60
      $region59: #{tpu_custom_call.1} parent=5 // pred_region
        %s752 = ssub.s32 %s21, 2
        // Predicated region
        $region61: #{tpu_custom_call.1} parent=59 // pred_check
          %p753 = pneg %p202
        $region62: #{tpu_custom_call.1} parent=59 // pred_check_branch
          %755 = sbr.rel (%p753) target = $region64
        $region63: #{tpu_custom_call.1} parent=59 // pred_region
          %s756 = sand.u32 %s187, 1
          %s757 = scalar_lea.sflag [#allocation4], %s756
          %s758 = sand.u32 %s187, 1
          %s759 = smul.addr %s758, 8
          %s760 = scalar_lea.vmem [#allocation3], %s759
          %761 = dma.done %s757, 128
        $region64: #{tpu_custom_call.1} parent=59 // pred_fallthru
          _
        // Predicated region
        $region65: #{tpu_custom_call.1} parent=59 // pred_check
          %p762 = pneg %p228
        $region66: #{tpu_custom_call.1} parent=59 // pred_check_branch
          %764 = sbr.rel (%p762) target = $region68
        $region67: #{tpu_custom_call.1} parent=59 // pred_region
          %s765 = sand.u32 %s213, 1
          %s766 = scalar_lea.sflag [#allocation6], %s765
          %s767 = sand.u32 %s213, 1
          %s768 = smul.addr %s767, 8
          %s769 = scalar_lea.vmem [#allocation5], %s768
          %770 = dma.done %s766, 128
        $region68: #{tpu_custom_call.1} parent=59 // pred_fallthru
          _
      $region60: #{tpu_custom_call.1} parent=5 // pred_fallthru
        _
    $region6: #{tpu_custom_call.1} parent=1 // loop_footer
      %s25 = sadd.s32 1, %s21
    $region7: #{tpu_custom_call.1} parent=1 // loop_footer_branch
      %20 = sbr.rel target = $region3
    $region8: #{tpu_custom_call.1} parent=1 // loop_exit
      _
    %771 = vsyncpa [#allocation4], 1
    %s772 = scalar_lea.sflag [#allocation4], 1
    %773 = vsyncpa %s772, 1
    %774 = vsyncpa [#allocation6], 1
    %s775 = scalar_lea.sflag [#allocation6], 1
    %776 = vsyncpa %s775, 1

</llo_original>
